<compile_context>
chip_gen: v6e
topology: v6e:2x2x1
jax: 0.10.0
libtpu: 0.0.40
codegen_flags: <defaults>
</compile_context>

<pallas_src>
import functools
import math

import jax
import jax.numpy as jnp
from jax.experimental import pallas as pl
from jax.experimental.pallas import tpu as pltpu


def _self_attention_kernel(x_ref, w_ref, b_ref, o_ref, *,
                           D, Dp, fold_batch, approx_reciprocal):
    Bb, N, _ = x_ref.shape
    M = Bb * N
    matmul_dtype = x_ref.dtype          # x already cast host-side

    # (Bb, N, D) -> (Bb*N, D): leading-dim merge only -> no relayout.
    x2 = x_ref[...].reshape(M, D)

    # One fused QKV projection matmul: (M, D) x (D, 3*Dp) -> (M, 3*Dp), f32 acc.
    y = jnp.dot(x2, w_ref[...], preferred_element_type=jnp.float32)
    y = y + b_ref[...]                   # single bias add (f32)

    # Slices at 128-lane boundaries (Dp is a multiple of 128) -> no relayout.
    q = y[:, :Dp]                        # 1/sqrt(D) already folded into wq/bq
    k = y[:, Dp:2 * Dp]
    v = y[:, 2 * Dp:3 * Dp]

    if fold_batch:
        # One lane-dense (M, M) score matmul; contract the last dims directly
        # (no explicit k.T, so no XLU transpose on the score stage).
        s = jax.lax.dot_general(
            q.astype(matmul_dtype), k.astype(matmul_dtype),
            (((1,), (1,)), ((), ())),
            preferred_element_type=jnp.float32)              # (M, M)

        if Bb > 1:
            # Block-diagonal mask: row i / col j belong to batch i//N, j//N.
            row_b = jax.lax.broadcasted_iota(jnp.int32, (M, M), 0) // N
            col_b = jax.lax.broadcasted_iota(jnp.int32, (M, M), 1) // N
            s = jnp.where(row_b == col_b, s, jnp.float32(-1e30))

        # Numerically-stable softmax over the key axis, in f32.
        s = s - jnp.max(s, axis=-1, keepdims=True)
        e = jnp.exp(s)
        denom = jnp.sum(e, axis=-1, keepdims=True)
        attn = e * pl.reciprocal(denom, approx=approx_reciprocal)

        out = jnp.dot(attn.astype(matmul_dtype), v.astype(matmul_dtype),
                      preferred_element_type=jnp.float32)    # (M, Dp)
        # Drop the zero pad columns and store unpadded (masked vst).
        o_ref[...] = out[:, :D].reshape(Bb, N, D).astype(o_ref.dtype)
    else:
        # Large-tile fallback: batched einsum path (leading-dim splits only).
        q3 = q.reshape(Bb, N, Dp)
        k3 = k.reshape(Bb, N, Dp)
        v3 = v.reshape(Bb, N, Dp)
        s = jnp.einsum("bqd,bkd->bqk",
                       q3.astype(matmul_dtype), k3.astype(matmul_dtype),
                       preferred_element_type=jnp.float32)   # (Bb, N, N)
        s = s - jnp.max(s, axis=-1, keepdims=True)
        e = jnp.exp(s)
        denom = jnp.sum(e, axis=-1, keepdims=True)
        attn = e * pl.reciprocal(denom, approx=approx_reciprocal)
        out = jnp.einsum("bqk,bkd->bqd",
                         attn.astype(matmul_dtype), v3.astype(matmul_dtype),
                         preferred_element_type=jnp.float32) # (Bb, N, Dp)
        o_ref[...] = out[..., :D].astype(o_ref.dtype)


def _vmem_budget_and_limit():
    """Generation-aware scoped-VMEM request and tile-sizing budget (bytes)."""
    try:
        cap = getattr(pltpu.get_tpu_info(), "vmem_capacity_bytes",
                      128 * 1024 * 1024)
    except Exception:
        cap = 64 * 1024 * 1024
    limit = min(cap // 2, 64 * 1024 * 1024)   # 64 MiB on v5e/v6e, 32 MiB on v7x
    budget = limit // 4                        # headroom for compiler scratch
    return budget, limit


_FOLD_BATCH_MAX_M = 512   # fold batch into one (M, M) score matmul when M <= this


def self_attention(x, wq, bq, wk, bk, wv, bv, *, block_b=None,
                   matmul_dtype=jnp.bfloat16, approx_reciprocal=True,
                   interpret=False):
    """Fused self-attention.

    x: (B, N, D) f32.  wq/wk/wv: (D, D) in PyTorch (out, in) layout.  b*: (D,).

    NOTE: the default uses bf16 MXU operands (f32 accumulation/softmax) and an
    approximate EUP reciprocal.  Pass matmul_dtype=jnp.float32,
    approx_reciprocal=False for exact f32 parity with the reference.
    """
    B, N, D = x.shape
    if N % 8 != 0:
        raise ValueError("sequence length must be a multiple of 8 (sublane tile)")

    scale = 1.0 / math.sqrt(D)
    Dp = pl.cdiv(D, 128) * 128            # lane-dense projection width (>= 128)
    budget, vmem_limit = _vmem_budget_and_limit()

    # --- host-side weight prep: fold scale into Wq/bq, transpose to (in, out),
    #     zero-pad the output-feature axis to Dp, concatenate Q|K|V. ----------
    def pad_w(w, s=1.0):
        return jnp.pad(w.T * s, ((0, 0), (0, Dp - D)))

    def pad_b(b, s=1.0):
        return jnp.pad(b * s, (0, Dp - D))

    w_qkv = jnp.concatenate([pad_w(wq, scale), pad_w(wk), pad_w(wv)],
                            axis=1).astype(matmul_dtype)              # (D, 3*Dp)
    b_qkv = jnp.concatenate([pad_b(bq, scale), pad_b(bk), pad_b(bv)]
                            ).reshape(1, 3 * Dp).astype(jnp.float32)  # (1, 3*Dp)

    x_in = x.astype(matmul_dtype)         # half-size input DMA when bf16
    x_item = jnp.dtype(matmul_dtype).itemsize

    # --- block_b auto-sizing ------------------------------------------------
    def est_bytes(bb):
        m = bb * N
        xb = m * D * x_item * 2                         # input tile, double-buffered
        ob = m * D * 4 * 2                              # output tile, double-buffered
        yb = m * 3 * Dp * 4                             # fused projection output (f32)
        wb = (D * 3 * Dp * x_item + 3 * Dp * 4) * 2     # weights + bias
        if m <= _FOLD_BATCH_MAX_M:
            sb = 2 * m * m * 4                          # scores + probs (f32)
            pb = m * Dp * 4                             # PV output (f32)
        else:
            sb = 2 * bb * N * N * 4
            pb = bb * N * Dp * 4
        return xb + ob + yb + wb + sb + pb

    if block_b is None:
        cap_b = max(1, pl.cdiv(B, 2)) if B > 1 else 1   # >=2 grid steps (v7x: 2 TCs)
        candidates = [d for d in range(1, B + 1)
                      if B % d == 0 and d <= cap_b and est_bytes(d) <= budget]
        if not candidates:
            candidates = [1]
        # Prefer the smallest tile that fills the MXU M dimension; else largest fitting.
        filled = [d for d in candidates if d * N >= 256]
        block_b = min(filled) if filled else max(candidates)
    if B % block_b != 0:
        raise ValueError("block_b must divide the batch size")

    grid = (B // block_b,)
    fold_batch = (block_b * N) <= _FOLD_BATCH_MAX_M

    kernel = functools.partial(_self_attention_kernel,
                               D=D, Dp=Dp, fold_batch=fold_batch,
                               approx_reciprocal=approx_reciprocal)

    x_spec = pl.BlockSpec((block_b, N, D), lambda b: (b, 0, 0))
    w_spec = pl.BlockSpec((D, 3 * Dp), lambda b: (0, 0))
    b_spec = pl.BlockSpec((1, 3 * Dp), lambda b: (0, 0))
    o_spec = pl.BlockSpec((block_b, N, D), lambda b: (b, 0, 0))

    out = pl.pallas_call(
        kernel,
        out_shape=jax.ShapeDtypeStruct((B, N, D), jnp.float32),
        grid_spec=pltpu.PrefetchScalarGridSpec(
            num_scalar_prefetch=0,
            grid=grid,
            in_specs=[x_spec, w_spec, b_spec],
            out_specs=o_spec,
        ),
        compiler_params=pltpu.CompilerParams(
            dimension_semantics=("parallel",),
            vmem_limit_bytes=vmem_limit),
        interpret=interpret,
    )(x_in, w_qkv, b_qkv)

    return out


def self_attention_ref(x, wq, bq, wk, bk, wv, bv):
    """Pure-JAX reference mirroring the PyTorch forward pass."""
    D = x.shape[-1]
    q = jnp.einsum("bnd,od->bno", x, wq) + bq
    k = jnp.einsum("bnd,od->bno", x, wk) + bk
    v = jnp.einsum("bnd,od->bno", x, wv) + bv
    s = jnp.einsum("bqd,bkd->bqk", q, k) / math.sqrt(D)
    attn = jax.nn.softmax(s, axis=2)
    return jnp.einsum("bqk,bkd->bqd", attn, v)


if __name__ == "__main__":
    B, N, D = 2, 8, 32  # small shapes: batch=2, seq=8, in_dim=32

    key = jax.random.PRNGKey(0)
    kx, kwq, kbq, kwk, kbk, kwv, kbv = jax.random.split(key, 7)

    bound = 1.0 / math.sqrt(D)
    x = jax.random.normal(kx, (B, N, D), dtype=jnp.float32)
    wq = jax.random.uniform(kwq, (D, D), jnp.float32, -bound, bound)
    bq = jax.random.uniform(kbq, (D,), jnp.float32, -bound, bound)
    wk = jax.random.uniform(kwk, (D, D), jnp.float32, -bound, bound)
    bk = jax.random.uniform(kbk, (D,), jnp.float32, -bound, bound)
    wv = jax.random.uniform(kwv, (D, D), jnp.float32, -bound, bound)
    bv = jax.random.uniform(kbv, (D,), jnp.float32, -bound, bound)

    ref = self_attention_ref(x, wq, bq, wk, bk, wv, bv)

    # Default fast path: bf16 MXU operands (f32 accumulation + softmax), EUP recip.
    out_fast = jax.block_until_ready(self_attention(x, wq, bq, wk, bk, wv, bv))
    assert out_fast.shape == (B, N, D)
    assert float(jnp.max(jnp.abs(out_fast - ref))) < 1e-1, \
        float(jnp.max(jnp.abs(out_fast - ref)))

    # Exact-precision path (f32 matmul operands, exact reciprocal).
    out_exact = jax.block_until_ready(
        self_attention(x, wq, bq, wk, bk, wv, bv,
                       matmul_dtype=jnp.float32, approx_reciprocal=False))
    assert out_exact.shape == (B, N, D)
    assert jnp.allclose(out_exact, ref, atol=1e-4, rtol=1e-4), \
        float(jnp.max(jnp.abs(out_exact - ref)))

    print("KERNEL_OK")
</pallas_src>

<mosaic_0001>
module attributes {stable_mosaic.version = 11 : i64} {
  func.func @_self_attention_kernel(%arg0: i32, %arg1: memref<1x8x32xbf16, #tpu.memory_space<vmem>>, %arg2: memref<32x384xbf16, #tpu.memory_space<vmem>>, %arg3: memref<1x384xf32, #tpu.memory_space<vmem>>, %arg4: memref<1x8x32xf32, #tpu.memory_space<vmem>>) attributes {dimension_semantics = [#tpu.dimension_semantics<parallel>], iteration_bounds = array<i64: 2>, scalar_prefetch = 0 : i64, scratch_operands = 0 : i64, tpu.core_type = #tpu.core_type<tc>, window_params = [{transform_indices = @transform_0, window_bounds = array<i64: 1, 8, 32>}, {pipeline_mode = #tpu.pipeline_mode<synchronous>, transform_indices = @transform_1, window_bounds = array<i64: 32, 384>}, {pipeline_mode = #tpu.pipeline_mode<synchronous>, transform_indices = @transform_2, window_bounds = array<i64: 1, 384>}, {transform_indices = @transform_3, window_bounds = array<i64: 1, 8, 32>}]} {
    %c0 = arith.constant 0 : index
    %c0_0 = arith.constant 0 : index
    %c0_1 = arith.constant 0 : index
    %0 = vector.load %arg1[%c0, %c0_0, %c0_1] : memref<1x8x32xbf16, #tpu.memory_space<vmem>>, vector<1x8x32xbf16>
    %1 = vector.shape_cast %0 : vector<1x8x32xbf16> to vector<8x32xbf16>
    %c0_2 = arith.constant 0 : index
    %c0_3 = arith.constant 0 : index
    %2 = vector.load %arg2[%c0_2, %c0_3] : memref<32x384xbf16, #tpu.memory_space<vmem>>, vector<32x384xbf16>
    %cst = arith.constant dense<0.000000e+00> : vector<8x384xf32>
    %3 = tpu.matmul %1, %2, %cst {dimension_numbers = #tpu.dot_dimension_numbers<[1], [0], [0], [1], [0, 0, 1, 1], [], []>} : vector<8x32xbf16>, vector<32x384xbf16>, vector<8x384xf32> -> vector<8x384xf32>
    %c0_4 = arith.constant 0 : index
    %c0_5 = arith.constant 0 : index
    %4 = vector.load %arg3[%c0_4, %c0_5] : memref<1x384xf32, #tpu.memory_space<vmem>>, vector<1x384xf32>
    %5 = vector.broadcast %4 : vector<1x384xf32> to vector<8x384xf32>
    %6 = arith.addf %3, %5 : vector<8x384xf32>
    %7 = vector.extract_strided_slice %6 {offsets = [0, 0], sizes = [8, 128], strides = [1, 1]} : vector<8x384xf32> to vector<8x128xf32>
    %8 = vector.extract_strided_slice %6 {offsets = [0, 128], sizes = [8, 128], strides = [1, 1]} : vector<8x384xf32> to vector<8x128xf32>
    %9 = vector.extract_strided_slice %6 {offsets = [0, 256], sizes = [8, 128], strides = [1, 1]} : vector<8x384xf32> to vector<8x128xf32>
    %10 = arith.truncf %7 : vector<8x128xf32> to vector<8x128xbf16>
    %11 = arith.truncf %8 : vector<8x128xf32> to vector<8x128xbf16>
    %cst_6 = arith.constant dense<0.000000e+00> : vector<8x8xf32>
    %12 = tpu.matmul %10, %11, %cst_6 {dimension_numbers = #tpu.dot_dimension_numbers<[1], [1], [0], [0], [0, 0, 1, 0], [], []>} : vector<8x128xbf16>, vector<8x128xbf16>, vector<8x8xf32> -> vector<8x8xf32>
    %cst_7 = arith.constant dense<0xFF800000> : vector<8xf32>
    %13 = vector.multi_reduction <maximumf>, %12, %cst_7 [1] : vector<8x8xf32> to vector<8xf32>
    %14 = vector.shape_cast %13 : vector<8xf32> to vector<8x1xf32>
    %15 = vector.broadcast %14 : vector<8x1xf32> to vector<8x8xf32>
    %16 = arith.subf %12, %15 : vector<8x8xf32>
    %17 = math.exp %16 : vector<8x8xf32>
    %cst_8 = arith.constant dense<0.000000e+00> : vector<8xf32>
    %18 = vector.multi_reduction <add>, %17, %cst_8 [1] : vector<8x8xf32> to vector<8xf32>
    %19 = vector.shape_cast %18 : vector<8xf32> to vector<8x1xf32>
    %20 = tpu.reciprocal %19 {approx = true} : vector<8x1xf32> -> vector<8x1xf32>
    %21 = vector.broadcast %20 : vector<8x1xf32> to vector<8x8xf32>
    %22 = arith.mulf %17, %21 : vector<8x8xf32>
    %23 = arith.truncf %22 : vector<8x8xf32> to vector<8x8xbf16>
    %24 = arith.truncf %9 : vector<8x128xf32> to vector<8x128xbf16>
    %cst_9 = arith.constant dense<0.000000e+00> : vector<8x128xf32>
    %25 = tpu.matmul %23, %24, %cst_9 {dimension_numbers = #tpu.dot_dimension_numbers<[1], [0], [0], [1], [0, 0, 1, 1], [], []>} : vector<8x8xbf16>, vector<8x128xbf16>, vector<8x128xf32> -> vector<8x128xf32>
    %26 = vector.extract_strided_slice %25 {offsets = [0, 0], sizes = [8, 32], strides = [1, 1]} : vector<8x128xf32> to vector<8x32xf32>
    %27 = vector.shape_cast %26 : vector<8x32xf32> to vector<1x8x32xf32>
    %c0_10 = arith.constant 0 : index
    %c0_11 = arith.constant 0 : index
    %c0_12 = arith.constant 0 : index
    %28 = vector.load %arg4[%c0_10, %c0_11, %c0_12] : memref<1x8x32xf32, #tpu.memory_space<vmem>>, vector<1x8x32xf32>
    tpu.vector_store %arg4[%c0_10, %c0_11, %c0_12], %27 {strides = array<i32>} : memref<1x8x32xf32, #tpu.memory_space<vmem>>, vector<1x8x32xf32>,
    return
  }
  func.func @transform_0(%arg0: i32) -> (i32, i32, i32) {
    %c0_i32 = arith.constant 0 : i32
    %c0_i32_0 = arith.constant 0 : i32
    %c0_i32_1 = arith.constant 0 : i32
    return %arg0, %c0_i32, %c0_i32_0 : i32, i32, i32
  }
  func.func @transform_1(%arg0: i32) -> (i32, i32) {
    %c0_i32 = arith.constant 0 : i32
    %c0_i32_0 = arith.constant 0 : i32
    %c0_i32_1 = arith.constant 0 : i32
    return %c0_i32, %c0_i32_0 : i32, i32
  }
  func.func @transform_2(%arg0: i32) -> (i32, i32) {
    %c0_i32 = arith.constant 0 : i32
    %c0_i32_0 = arith.constant 0 : i32
    %c0_i32_1 = arith.constant 0 : i32
    return %c0_i32, %c0_i32_0 : i32, i32
  }
  func.func @transform_3(%arg0: i32) -> (i32, i32, i32) {
    %c0_i32 = arith.constant 0 : i32
    %c0_i32_0 = arith.constant 0 : i32
    %c0_i32_1 = arith.constant 0 : i32
    return %arg0, %c0_i32, %c0_i32_0 : i32, i32, i32
  }
}

</mosaic_0001>

<llo_original>
// kernel: tpu_custom_call.1
$region0: #{tpu_custom_call.1}
  #allocation0 [shape = 'u32[]', space=smem, size = 0x4, offset = 0x4, fixed_abs, tag = 'smem constant byte address 0x4 - core index']
  #allocation1 [shape = 'u32[144,128]{1,0:T(1,128)}', space=vmem, size = 0x12000, scoped, tag = 'internal scratch']
  %s0 = inlined_call_operand.hbm [shape: bf16[2,8,32], index: 0, kind: input, shape index: {}]
  %s1 = inlined_call_operand.hbm [shape: bf16[32,384], index: 1, kind: input, shape index: {}]
  %s2 = inlined_call_operand.vmem [shape: f32[1,384], index: 2, kind: input, shape index: {}]
  %s3 = inlined_call_operand.hbm [shape: f32[2,8,32], index: 3, kind: output, shape index: {}]
  %s4 = sld [smem:[#allocation0]]
  $region53: #{tpu_custom_call.1} parent=0
    _
  %s6 = ssub.s32 1, %s4
  %s7 = scalar_select 0, %s6, %s4
  $region1: #{tpu_custom_call.1} parent=0
    #allocation2 [shape = 'u8[4096]{0}', space=vmem, size = 0x1000, scoped, tag = 'input window, operand 0']
    #allocation3 [shape = 's32[2]{0}', space=sflag, size = 0x8, scoped, tag = 'scoped memory for tpu_custom_call.1']
    #allocation4 [shape = 's32[2]{0}', space=sflag, size = 0x8, scoped, tag = 'scoped memory for tpu_custom_call.1']
    #allocation5 [shape = 'u8[24576]{0}', space=vmem, size = 0x6000, scoped, tag = 'input window, operand 1, single buffered']
    #allocation6 [shape = 's32[1]{0}', space=sflag, size = 0x4, scoped, tag = 'scoped memory for tpu_custom_call.1']
    #allocation7 [shape = 'u8[8192]{0}', space=vmem, size = 0x2000, scoped, tag = 'output window, operand 0']
    %8 = vsyncpa [#allocation3], 0
    %s9 = scalar_lea.sflag [#allocation3], 1
    %10 = vsyncpa %s9, 0
    %11 = vsyncpa [#allocation6], 0
    %12 = vsyncpa [#allocation4], 0
    %s13 = scalar_lea.sflag [#allocation4], 1
    %14 = vsyncpa %s13, 0
    loop: start=0, step=1, limit=4
    $region2: #{tpu_custom_call.1} parent=1 // loop_pre_header
      _
    $region3: #{tpu_custom_call.1} parent=1 // loop_header
      %s16 = sphi 0, %s20
      %p17 = scmp.ge.s32.totalorder %s16, 4
      %s26 = sphi 0, %s28
      %s29 = sphi 0, %s26
      %s30 = sphi 0, %s29
      %s46 = sphi 0, %s30
      %s50 = sphi 0, %s50
      %s52 = sphi 0, %s50
      %s53 = sphi 0, %s52
      %s67 = sphi 0, %s53
      %s71 = sphi 0, %s71
      %s73 = sphi 0, %s71
      %s74 = sphi 0, %s73
      %s88 = sphi 0, %s74
      %s94 = sphi 0, %s96
      %s97 = sphi 0, %s94
      %s98 = sphi 0, %s97
      %s114 = sphi 0, %s98
    $region4: #{tpu_custom_call.1} parent=1 // loop_header_branch
      %19 = sbr.rel (%p17) target = $region8
    $region5: #{tpu_custom_call.1} parent=1 // loop_body
      %s21 = ssub.s32 %s16, 1
      %s22 = ssub.s32 %s16, 2
      %s23 = sadd.s32 %s16, 1
      %s24 = ssub.s32 %s16, %s23
      %p25 = scmp.eq.s32.totalorder %s24, 0
      %s27 = sadd.s32 %s26, 1
      %s28 = scalar_select %p25, %s26, %s27
      %p31 = pneg %p25
      %p32 = scmp.eq.s32.totalorder %s16, 1
      %p33 = por %p31, %p32
      %p34 = scmp.ne.s32.totalorder %s26, %s29
      %p35 = scmp.eq.s32.totalorder %s16, 0
      %p36 = por %p34, %p35
      %p37 = scmp.ne.s32.totalorder %s26, %s29
      %p38 = scmp.eq.s32.totalorder %s21, 1
      %p39 = por %p37, %p38
      %p40 = scmp.ne.s32.totalorder %s29, %s30
      %p41 = scmp.eq.s32.totalorder %s21, 0
      %p42 = por %p40, %p41
      %p43 = scmp.ne.s32.totalorder %s29, %s30
      %p44 = scmp.eq.s32.totalorder %s22, 1
      %p45 = por %p43, %p44
      %p47 = scmp.ne.s32.totalorder %s30, %s46
      %p48 = scmp.eq.s32.totalorder %s22, 0
      %p49 = por %p47, %p48
      %s51 = sadd.s32 %s50, 1
      %p54 = scmp.eq.s32.totalorder %s16, 1
      %p55 = scmp.ne.s32.totalorder %s50, %s52
      %p56 = scmp.eq.s32.totalorder %s16, 0
      %p57 = por %p55, %p56
      %p58 = scmp.ne.s32.totalorder %s50, %s52
      %p59 = scmp.eq.s32.totalorder %s21, 1
      %p60 = por %p58, %p59
      %p61 = scmp.ne.s32.totalorder %s52, %s53
      %p62 = scmp.eq.s32.totalorder %s21, 0
      %p63 = por %p61, %p62
      %p64 = scmp.ne.s32.totalorder %s52, %s53
      %p65 = scmp.eq.s32.totalorder %s22, 1
      %p66 = por %p64, %p65
      %p68 = scmp.ne.s32.totalorder %s53, %s67
      %p69 = scmp.eq.s32.totalorder %s22, 0
      %p70 = por %p68, %p69
      %s72 = sadd.s32 %s71, 1
      %p75 = scmp.eq.s32.totalorder %s16, 1
      %p76 = scmp.ne.s32.totalorder %s71, %s73
      %p77 = scmp.eq.s32.totalorder %s16, 0
      %p78 = por %p76, %p77
      %p79 = scmp.ne.s32.totalorder %s71, %s73
      %p80 = scmp.eq.s32.totalorder %s21, 1
      %p81 = por %p79, %p80
      %p82 = scmp.ne.s32.totalorder %s73, %s74
      %p83 = scmp.eq.s32.totalorder %s21, 0
      %p84 = por %p82, %p83
      %p85 = scmp.ne.s32.totalorder %s73, %s74
      %p86 = scmp.eq.s32.totalorder %s22, 1
      %p87 = por %p85, %p86
      %p89 = scmp.ne.s32.totalorder %s74, %s88
      %p90 = scmp.eq.s32.totalorder %s22, 0
      %p91 = por %p89, %p90
      %s92 = ssub.s32 %s16, %s23
      %p93 = scmp.eq.s32.totalorder %s92, 0
      %s95 = sadd.s32 %s94, 1
      %s96 = scalar_select %p93, %s94, %s95
      %p99 = pneg %p93
      %p100 = scmp.eq.s32.totalorder %s16, 1
      %p101 = por %p99, %p100
      %p102 = scmp.ne.s32.totalorder %s94, %s97
      %p103 = scmp.eq.s32.totalorder %s16, 0
      %p104 = por %p102, %p103
      %p105 = scmp.ne.s32.totalorder %s94, %s97
      %p106 = scmp.eq.s32.totalorder %s21, 1
      %p107 = por %p105, %p106
      %p108 = scmp.ne.s32.totalorder %s97, %s98
      %p109 = scmp.eq.s32.totalorder %s21, 0
      %p110 = por %p108, %p109
      %p111 = scmp.ne.s32.totalorder %s97, %s98
      %p112 = scmp.eq.s32.totalorder %s22, 1
      %p113 = por %p111, %p112
      %p115 = scmp.ne.s32.totalorder %s98, %s114
      %p116 = scmp.eq.s32.totalorder %s22, 0
      %p117 = por %p115, %p116
      %p118 = scmp.le.s32.totalorder 1, %s16
      %p119 = scmp.lt.s32.totalorder %s16, 3
      %p120 = pnand %p118, %p119
      %p121 = pneg %p120
      // Predicated region
      $region9: #{tpu_custom_call.1} parent=5 // pred_check
        _
      $region10: #{tpu_custom_call.1} parent=5 // pred_check_branch
        %123 = sbr.rel (%p120) target = $region12
      $region11: #{tpu_custom_call.1} parent=5 // pred_region
        %s124 = ssub.s32 %s16, 1
        // Predicated region
        $region13: #{tpu_custom_call.1} parent=11 // pred_check
          %p125 = pneg %p63
        $region14: #{tpu_custom_call.1} parent=11 // pred_check_branch
          %127 = sbr.rel (%p125) target = $region16
        $region15: #{tpu_custom_call.1} parent=11 // pred_region
          %s129 = ssub.s32 768, 768
          %130 = vsyncadd [#allocation6], %s129
          %s131 = sshll.u32 [#allocation5], 4
          %s132 = int_to_ptr.vmem [resolvable:$true] %s131
          %137 = dma.hbm_to_vmem [thread:$0]  %s1, 768, %s132, [#allocation6], 192, 192, 12
        $region16: #{tpu_custom_call.1} parent=11 // pred_fallthru
          _
        // Predicated region
        $region17: #{tpu_custom_call.1} parent=11 // pred_check
          %p138 = pneg %p84
        $region18: #{tpu_custom_call.1} parent=11 // pred_check_branch
          %140 = sbr.rel (%p138) target = $region20
        $region19: #{tpu_custom_call.1} parent=11 // pred_region
          _
        $region20: #{tpu_custom_call.1} parent=11 // pred_fallthru
          _
      $region12: #{tpu_custom_call.1} parent=5 // pred_fallthru
        _
      %p141 = scmp.lt.s32.totalorder %s16, 2
      // Predicated region
      $region21: #{tpu_custom_call.1} parent=5 // pred_check
        %p142 = pneg %p141
      $region22: #{tpu_custom_call.1} parent=5 // pred_check_branch
        %144 = sbr.rel (%p142) target = $region24
      $region23: #{tpu_custom_call.1} parent=5 // pred_region
        // Predicated region
        $region25: #{tpu_custom_call.1} parent=23 // pred_check
          %p145 = pneg %p36
        $region26: #{tpu_custom_call.1} parent=23 // pred_check_branch
          %147 = sbr.rel (%p145) target = $region28
        $region27: #{tpu_custom_call.1} parent=23 // pred_region
          %s148 = sand.u32 %s26, 1
          %s149 = scalar_lea.sflag [#allocation3], %s148
          %s150 = sand.u32 %s26, 1
          %s151 = smul.addr %s150, 4
          %s152 = scalar_lea.vmem [#allocation2], %s151
          %s154 = ssub.s32 64, 64
          %155 = vsyncadd %s149, %s154
          %s156 = smul.addr %s16, 64
          %s157 = scalar_lea.hbm %s0, %s156
          %s159 = sshll.u32 %s152, 4
          %s160 = int_to_ptr.vmem [resolvable:$true] %s159
          %162 = dma.hbm_to_vmem [thread:$0]  %s157, 64, %s160, %s149
        $region28: #{tpu_custom_call.1} parent=23 // pred_fallthru
          _
      $region24: #{tpu_custom_call.1} parent=5 // pred_fallthru
        _
      %p163 = scmp.le.s32.totalorder 1, %s16
      %p164 = scmp.lt.s32.totalorder %s16, 3
      %p165 = pnand %p163, %p164
      %p166 = pneg %p165
      // Predicated region
      $region29: #{tpu_custom_call.1} parent=5 // pred_check
        _
      $region30: #{tpu_custom_call.1} parent=5 // pred_check_branch
        %168 = sbr.rel (%p165) target = $region32
      $region31: #{tpu_custom_call.1} parent=5 // pred_region
        %s169 = ssub.s32 %s16, 1
        %s170 = sand.u32 %s29, 1
        %s171 = scalar_lea.sflag [#allocation3], %s170
        %s172 = sand.u32 %s29, 1
        %s173 = smul.addr %s172, 4
        %s174 = scalar_lea.vmem [#allocation2], %s173
        // Predicated region
        $region33: #{tpu_custom_call.1} parent=31 // pred_check
          %p175 = pneg %p42
        $region34: #{tpu_custom_call.1} parent=31 // pred_check_branch
          %177 = sbr.rel (%p175) target = $region36
        $region35: #{tpu_custom_call.1} parent=31 // pred_region
          %178 = dma.done %s171, 64
        $region36: #{tpu_custom_call.1} parent=31 // pred_fallthru
          _
        // Predicated region
        $region37: #{tpu_custom_call.1} parent=31 // pred_check
          %p179 = pneg %p63
        $region38: #{tpu_custom_call.1} parent=31 // pred_check_branch
          %181 = sbr.rel (%p179) target = $region40
        $region39: #{tpu_custom_call.1} parent=31 // pred_region
          %182 = dma.done [#allocation6], 768
        $region40: #{tpu_custom_call.1} parent=31 // pred_fallthru
          _
        %s183 = sand.u32 %s29, 1
        %s184 = scalar_lea.sflag [#allocation3], %s183
        %s185 = sand.u32 %s29, 1
        %s186 = smul.addr %s185, 4
        %s187 = scalar_lea.vmem [#allocation2], %s186
        %p188 = pneg %p42
        %p189 = pneg %p39
        %p190 = pneg %p63
        %p191 = pneg %p60
        %p192 = pneg %p84
        %p193 = pneg %p81
        %p194 = pneg %p110
        %p195 = pneg %p107
        %s196 = sand.u32 %s97, 1
        %s197 = scalar_lea.sflag [#allocation4], %s196
        %s198 = sand.u32 %s97, 1
        %s199 = smul.addr %s198, 8
        %s200 = scalar_lea.vmem [#allocation7], %s199
        %v202 = vld [vmem:[%s174] sm:$0xf]
        %v203 = vld [vmem:[#allocation5] sm:$0xff]
        %v204 = vld [vmem:[#allocation5 + $0x8] sm:$0xf]
        %v205 = vld [vmem:[#allocation5 + $0xc] sm:$0xff]
        %v206 = vld [vmem:[#allocation5 + $0x14] sm:$0xf]
        %v207 = vld [vmem:[#allocation5 + $0x18] sm:$0xff]
        %v208 = vld [vmem:[#allocation5 + $0x20] sm:$0xf]
        %v209 = vld [vmem:[#allocation5 + $0x24] sm:$0xff]
        %v210 = vld [vmem:[#allocation5 + $0x2c] sm:$0xf]
        %v211 = vld [vmem:[%s2] sm:$0x7]
        %v213 = vlaneseq
        %v214 = vshrl.u32 %v213, 7
        %v215 = vsub.s32 0, %v214
        %v216 = vrot.slane %v211, %v215
        %v217 = vlaneseq
        %v218 = vshrl.u32 %v217, 7
        %v219 = vsub.s32 1, %v218
        %v220 = vrot.slane %v211, %v219
        %v221 = vlaneseq
        %v222 = vshrl.u32 %v221, 7
        %v223 = vsub.s32 2, %v222
        %v224 = vrot.slane %v211, %v223
        %v236 = vunpack.c.l.b16 %v203
        %v237 = vunpack.c.h.b16 %v203
        %v238 = vunpack.c.l.b16 %v204
        %v239 = vunpack.c.l.b16 %v205
        %v240 = vunpack.c.h.b16 %v205
        %v241 = vunpack.c.l.b16 %v206
        %v242 = vunpack.c.l.b16 %v207
        %v243 = vunpack.c.h.b16 %v207
        %v244 = vunpack.c.l.b16 %v208
        %v245 = vunpack.c.l.b16 %v209
        %v246 = vunpack.c.h.b16 %v209
        %v247 = vunpack.c.l.b16 %v210
        %v248 = vpack.c.b16 %v239, %v236
        %v249 = vpack.c.b16 %v240, %v237
        %v250 = vpack.c.b16 %v241, %v238
        %v251 = vpack.c.b16 %v245, %v242
        %v252 = vpack.c.b16 %v246, %v243
        %v253 = vpack.c.b16 %v247, %v244
        %vm260 = vcmask 261120
        %v262 = vsel %vm260, %v202, 0
        %264 = vmatprep.subr.bf16.mxu0 0
        %265 = vmatpush1.bf16.msra.mxu0 0
        %266 = vmatprep.subr.bf16.mxu0 0
        %267 = vmatpush1.bf16.msra.mxu0 0
        %268 = vmatprep.subr.bf16.mxu0 0
        %269 = vmatpush1.bf16.msra.mxu0 0
        %270 = vmatprep.subr.bf16.mxu0 0
        %271 = vmatpush1.bf16.msra.mxu0 0
        %272 = vmatprep.subr.bf16.mxu0 0
        %273 = vmatpush1.bf16.msra.mxu0 0
        %274 = vmatprep.subr.bf16.mxu0 0
        %275 = vmatpush1.bf16.msra.mxu0 0
        %276 = vmatprep.subr.bf16.mxu0 %v252
        %277 = vmatpush1.bf16.msra.mxu0 %v251
        %278 = vmatprep.subr.bf16.mxu0 %v249
        %279 = vmatpush1.bf16.msra.mxu0 %v248
        %280 = vmatprep.subr.bf16.mxu0 0
        %281 = vmatpush2.bf16.msra.mxu0 0
        %282 = vmatprep.subr.bf16.mxu0 0
        %283 = vmatpush2.bf16.msra.mxu0 0
        %284 = vmatprep.subr.bf16.mxu0 0
        %285 = vmatpush2.bf16.msra.mxu0 0
        %286 = vmatprep.subr.bf16.mxu0 0
        %287 = vmatpush2.bf16.msra.mxu0 0
        %288 = vmatprep.subr.bf16.mxu0 0
        %289 = vmatpush2.bf16.msra.mxu0 0
        %290 = vmatprep.subr.bf16.mxu0 0
        %291 = vmatpush2.bf16.msra.mxu0 0
        %292 = vmatprep.subr.bf16.mxu0 0
        %293 = vmatpush2.bf16.msra.mxu0 0
        %294 = vmatprep.subr.bf16.mxu0 0
        %295 = vmatpush2.bf16.msra.mxu0 0
        %296 = vmatprep.mubr.bf16.mxu0 0
        %297 = vmatmul.mubr.bf16.gmra.mxu0 %v262
        %v298 = vpop.f32.mrf.mxu0
        %v299 = vadd.f32 %v216, %v298
        %v300 = vpop.f32.mrf.mxu0
        %v301 = vadd.f32 %v220, %v300
        %v302 = vpop.f32.mrf.mxu0
        %v303 = vpop.f32.mrf.mxu0
        %304 = vdwg.mxu0
        %305 = vmatprep.subr.bf16.mxu0 0
        %306 = vmatpush1.bf16.msra.mxu0 0
        %307 = vmatprep.subr.bf16.mxu0 0
        %308 = vmatpush1.bf16.msra.mxu0 0
        %309 = vmatprep.subr.bf16.mxu0 0
        %310 = vmatpush1.bf16.msra.mxu0 0
        %311 = vmatprep.subr.bf16.mxu0 0
        %312 = vmatpush1.bf16.msra.mxu0 0
        %313 = vmatprep.subr.bf16.mxu0 0
        %314 = vmatpush1.bf16.msra.mxu0 0
        %315 = vmatprep.subr.bf16.mxu0 0
        %316 = vmatpush1.bf16.msra.mxu0 0
        %317 = vmatprep.subr.bf16.mxu0 0
        %318 = vmatpush1.bf16.msra.mxu0 %v253
        %319 = vmatprep.subr.bf16.mxu0 0
        %320 = vmatpush1.bf16.msra.mxu0 %v250
        %321 = vmatprep.subr.bf16.mxu0 0
        %322 = vmatpush2.bf16.msra.mxu0 0
        %323 = vmatprep.subr.bf16.mxu0 0
        %324 = vmatpush2.bf16.msra.mxu0 0
        %325 = vmatprep.subr.bf16.mxu0 0
        %326 = vmatpush2.bf16.msra.mxu0 0
        %327 = vmatprep.subr.bf16.mxu0 0
        %328 = vmatpush2.bf16.msra.mxu0 0
        %329 = vmatprep.subr.bf16.mxu0 0
        %330 = vmatpush2.bf16.msra.mxu0 0
        %331 = vmatprep.subr.bf16.mxu0 0
        %332 = vmatpush2.bf16.msra.mxu0 0
        %333 = vmatprep.subr.bf16.mxu0 0
        %334 = vmatpush2.bf16.msra.mxu0 0
        %335 = vmatprep.subr.bf16.mxu0 0
        %336 = vmatpush2.bf16.msra.mxu0 0
        %337 = vmatprep.mubr.bf16.mxu0 0
        %338 = vmatmul.mubr.bf16.gmra.mxu0 %v262
        %v339 = vpop.f32.mrf.mxu0
        %v340 = vadd.f32 %v224, %v339
        %v341 = vpop.f32.mrf.mxu0
        %v342 = vpop.f32.mrf.mxu0
        %v343 = vpop.f32.mrf.mxu0
        %344 = vdwg.mxu0
        %v345 = vpack.c.bf16 %v299, %v299
        %v346 = vpack.c.bf16 %v301, %v301
        %347 = vmatprep.subr.bf16.mxu0 0
        %348 = vmatpush1.bf16.xpose.msra.mxu0 0
        %349 = vmatprep.subr.bf16.mxu0 0
        %350 = vmatpush1.bf16.xpose.msra.mxu0 0
        %351 = vmatprep.subr.bf16.mxu0 0
        %352 = vmatpush1.bf16.xpose.msra.mxu0 0
        %353 = vmatprep.subr.bf16.mxu0 0
        %354 = vmatpush1.bf16.xpose.msra.mxu0 0
        %355 = vmatprep.subr.bf16.mxu0 0
        %356 = vmatpush1.bf16.xpose.msra.mxu0 0
        %357 = vmatprep.subr.bf16.mxu0 0
        %358 = vmatpush1.bf16.xpose.msra.mxu0 0
        %359 = vmatprep.subr.bf16.mxu0 0
        %360 = vmatpush1.bf16.xpose.msra.mxu0 0
        %361 = vmatprep.subr.bf16.mxu0 0
        %362 = vmatpush1.bf16.xpose.msra.mxu0 %v346
        %363 = vmatprep.subr.bf16.mxu0 0
        %364 = vmatpush2.bf16.xpose.msra.mxu0 0
        %365 = vmatprep.subr.bf16.mxu0 0
        %366 = vmatpush2.bf16.xpose.msra.mxu0 0
        %367 = vmatprep.subr.bf16.mxu0 0
        %368 = vmatpush2.bf16.xpose.msra.mxu0 0
        %369 = vmatprep.subr.bf16.mxu0 0
        %370 = vmatpush2.bf16.xpose.msra.mxu0 0
        %371 = vmatprep.subr.bf16.mxu0 0
        %372 = vmatpush2.bf16.xpose.msra.mxu0 0
        %373 = vmatprep.subr.bf16.mxu0 0
        %374 = vmatpush2.bf16.xpose.msra.mxu0 0
        %375 = vmatprep.subr.bf16.mxu0 0
        %376 = vmatpush2.bf16.xpose.msra.mxu0 0
        %377 = vmatprep.subr.bf16.mxu0 0
        %378 = vmatpush2.bf16.xpose.msra.mxu0 0
        %379 = vmatprep.mubr.bf16.mxu0 0
        %380 = vmatmul.mubr.bf16.gmra.mxu0 %v345
        %v381 = vpop.f32.mrf.mxu0
        %v382 = vadd.f32 0.0, %v381
        %v383 = vpop.f32.mrf.mxu0
        %v384 = vpop.f32.mrf.mxu0
        %v385 = vpop.f32.mrf.mxu0
        %386 = vdwg.mxu0
        %vm387 = vcmask 64512
        %v388 = vsel %vm387, %v382, -inf
        %389 = vmax.xlane.f32.xlu0 %v388
        %v390 = vpop.xlane.xlu0 %389
        %v391 = vsub.f32 %v382, %v390
        %v392 = vmul.f32 %v391, 1.442695
        %v393 = vpow.pop %v392
        %v394 = vsel %vm387, %v393, 0.0
        %395 = vadd.xlane.f32.xlu0 %v394
        %v396 = vpop.xlane.xlu0 %395
        %v397 = vrcp.pop %v396
        %v398 = vmul.f32 %v393, %v397
        %v399 = vpack.c.bf16 %v398, %v398
        %v400 = vpack.c.bf16 %v340, %v340
        %v402 = vsel %vm387, %v399, 0
        %vm404 = vcmask 1043456
        %v406 = vsel %vm404, %v400, 0
        %408 = vmatprep.subr.bf16.mxu0 0
        %409 = vmatpush1.bf16.msra.mxu0 0
        %410 = vmatprep.subr.bf16.mxu0 0
        %411 = vmatpush1.bf16.msra.mxu0 0
        %412 = vmatprep.subr.bf16.mxu0 0
        %413 = vmatpush1.bf16.msra.mxu0 0
        %414 = vmatprep.subr.bf16.mxu0 0
        %415 = vmatpush1.bf16.msra.mxu0 0
        %416 = vmatprep.subr.bf16.mxu0 0
        %417 = vmatpush1.bf16.msra.mxu0 0
        %418 = vmatprep.subr.bf16.mxu0 0
        %419 = vmatpush1.bf16.msra.mxu0 0
        %420 = vmatprep.subr.bf16.mxu0 0
        %421 = vmatpush1.bf16.msra.mxu0 0
        %422 = vmatprep.subr.bf16.mxu0 0
        %423 = vmatpush1.bf16.msra.mxu0 %v406
        %424 = vmatprep.subr.bf16.mxu0 0
        %425 = vmatpush2.bf16.msra.mxu0 0
        %426 = vmatprep.subr.bf16.mxu0 0
        %427 = vmatpush2.bf16.msra.mxu0 0
        %428 = vmatprep.subr.bf16.mxu0 0
        %429 = vmatpush2.bf16.msra.mxu0 0
        %430 = vmatprep.subr.bf16.mxu0 0
        %431 = vmatpush2.bf16.msra.mxu0 0
        %432 = vmatprep.subr.bf16.mxu0 0
        %433 = vmatpush2.bf16.msra.mxu0 0
        %434 = vmatprep.subr.bf16.mxu0 0
        %435 = vmatpush2.bf16.msra.mxu0 0
        %436 = vmatprep.subr.bf16.mxu0 0
        %437 = vmatpush2.bf16.msra.mxu0 0
        %438 = vmatprep.subr.bf16.mxu0 0
        %439 = vmatpush2.bf16.msra.mxu0 0
        %440 = vmatprep.mubr.bf16.mxu0 0
        %441 = vmatmul.mubr.bf16.gmra.mxu0 %v402
        %v442 = vpop.f32.mrf.mxu0
        %v443 = vadd.f32 0.0, %v442
        %v444 = vpop.f32.mrf.mxu0
        %v445 = vpop.f32.mrf.mxu0
        %v446 = vpop.f32.mrf.mxu0
        %447 = vdwg.mxu0
        %448 = vst.msk [vmem:[%s200] sm:$0xff] %vm260, %v443
        %s449 = sand.u32 %s97, 1
        %s450 = scalar_lea.sflag [#allocation4], %s449
        %s451 = sand.u32 %s97, 1
        %s452 = smul.addr %s451, 8
        %s453 = scalar_lea.vmem [#allocation7], %s452
        // Predicated region
        $region41: #{tpu_custom_call.1} parent=31 // pred_check
          %p454 = pneg %p107
        $region42: #{tpu_custom_call.1} parent=31 // pred_check_branch
          %456 = sbr.rel (%p454) target = $region44
        $region43: #{tpu_custom_call.1} parent=31 // pred_region
          %s458 = ssub.s32 128, 128
          %459 = vsyncadd %s450, %s458
          %s460 = smul.addr %s21, 128
          %s461 = scalar_lea.hbm %s3, %s460
          %s463 = sshll.u32 %s453, 4
          %s464 = int_to_ptr.vmem [resolvable:$true] %s463
          %466 = dma.vmem_to_hbm [thread:$0]  %s464, 128, %s461, %s450
        $region44: #{tpu_custom_call.1} parent=31 // pred_fallthru
          _
      $region32: #{tpu_custom_call.1} parent=5 // pred_fallthru
        _
      %p467 = scmp.le.s32.totalorder 2, %s16
      // Predicated region
      $region45: #{tpu_custom_call.1} parent=5 // pred_check
        %p468 = pneg %p467
      $region46: #{tpu_custom_call.1} parent=5 // pred_check_branch
        %470 = sbr.rel (%p468) target = $region48
      $region47: #{tpu_custom_call.1} parent=5 // pred_region
        %s471 = ssub.s32 %s16, 2
        // Predicated region
        $region49: #{tpu_custom_call.1} parent=47 // pred_check
          %p472 = pneg %p113
        $region50: #{tpu_custom_call.1} parent=47 // pred_check_branch
          %474 = sbr.rel (%p472) target = $region52
        $region51: #{tpu_custom_call.1} parent=47 // pred_region
          %s475 = sand.u32 %s98, 1
          %s476 = scalar_lea.sflag [#allocation4], %s475
          %s477 = sand.u32 %s98, 1
          %s478 = smul.addr %s477, 8
          %s479 = scalar_lea.vmem [#allocation7], %s478
          %480 = dma.done %s476, 128
        $region52: #{tpu_custom_call.1} parent=47 // pred_fallthru
          _
      $region48: #{tpu_custom_call.1} parent=5 // pred_fallthru
        _
    $region6: #{tpu_custom_call.1} parent=1 // loop_footer
      %s20 = sadd.s32 1, %s16
    $region7: #{tpu_custom_call.1} parent=1 // loop_footer_branch
      %15 = sbr.rel target = $region3
    $region8: #{tpu_custom_call.1} parent=1 // loop_exit
      _
    %481 = vsyncpa [#allocation3], 1
    %s482 = scalar_lea.sflag [#allocation3], 1
    %483 = vsyncpa %s482, 1
    %484 = vsyncpa [#allocation6], 1
    %485 = vsyncpa [#allocation4], 1
    %s486 = scalar_lea.sflag [#allocation4], 1
    %487 = vsyncpa %s486, 1

</llo_original>
